<compile_context>
chip_gen: v7x
topology: tpu7x:2x2x1
jax: 0.10.0
libtpu: 0.0.40
codegen_flags: <defaults>
</compile_context>

<pallas_src>
import jax
import jax.numpy as jnp
from jax.experimental import pallas as pl
from jax.experimental.pallas import tpu as pltpu


def mlp_kernel(x_ref, w1_ref, b1_ref, w2_ref, b2_ref, w3_ref, b3_ref,
               w4_ref, b4_ref, o_ref):
    """Fused 4-layer MLP on one (padded, lane-dense) batch tile.

    All matmuls accumulate in f32 on the MXU; bias add + ReLU run in f32 on the
    VPU; activations are cast back to the compute dtype (f32 or bf16) before
    feeding the next matmul.
    """
    cdt = w1_ref.dtype  # compute dtype for the MXU operands (f32 or bf16)

    h = jnp.dot(x_ref[...], w1_ref[...],
                preferred_element_type=jnp.float32) + b1_ref[...]
    h = jnp.maximum(h, 0.0).astype(cdt)

    h = jnp.dot(h, w2_ref[...],
                preferred_element_type=jnp.float32) + b2_ref[...]
    h = jnp.maximum(h, 0.0).astype(cdt)

    h = jnp.dot(h, w3_ref[...],
                preferred_element_type=jnp.float32) + b3_ref[...]
    h = jnp.maximum(h, 0.0).astype(cdt)

    out = jnp.dot(h, w4_ref[...],
                  preferred_element_type=jnp.float32) + b4_ref[...]
    o_ref[...] = out.astype(o_ref.dtype)


def _round_up(n, m):
    return ((n + m - 1) // m) * m


def _pad_to(a, shape):
    return jnp.pad(a, [(0, t - s) for s, t in zip(a.shape, shape)])


def baseline_forward(x, params, *, tile_b=None, compute_dtype=jnp.float32,
                     lane=128, sublane=8):
    """Pallas fused-MLP forward.

    params: [(W, b), ...] with W already [in, out] and b [1, out]. Feature dims
    are zero-padded to `lane` multiples and the batch to `sublane` multiples;
    the result is sliced back to (B, d_out).
    """
    (w1, b1), (w2, b2), (w3, b3), (w4, b4) = params
    B, d_in = x.shape
    d_out = w4.shape[1]

    # Lane-dense feature dims (multiples of 128).
    dims = [d_in, w1.shape[1], w2.shape[1], w3.shape[1], d_out]
    pdims = [_round_up(d, lane) for d in dims]

    # Sublane-aligned batch; collapse the grid by default (cap the tile so a
    # very large batch still fits comfortably in VMEM).
    B_p = _round_up(B, sublane)
    if tile_b is None:
        tile_b = min(B_p, 1024)
    tile_b = min(tile_b, B_p)
    B_p = _round_up(B_p, tile_b)
    grid_b = B_p // tile_b

    # Zero-pad operands (exact: padded rows/cols contribute 0) and cast the
    # MXU operands to the compute dtype.  Biases stay f32 (added after the
    # f32 accumulation).
    x_p = _pad_to(x, (B_p, pdims[0])).astype(compute_dtype)
    wbs = []
    for (w, b), kp, npad in zip(((w1, b1), (w2, b2), (w3, b3), (w4, b4)),
                                pdims[:-1], pdims[1:]):
        wbs.append(_pad_to(w, (kp, npad)).astype(compute_dtype))
        wbs.append(_pad_to(b, (1, npad)).astype(jnp.float32))

    def resident(arr):
        # Whole array, same block every grid step: weights/biases stay
        # resident in VMEM across batch tiles.  Total resident bytes here are
        # < 0.5 MiB, so double-buffering them is negligible; for much larger
        # MLPs switch to pipeline_mode=pl.Buffered(1) or stream the biggest
        # layer over a K/N grid axis (64 MiB VMEM on v7x).
        nd = arr.ndim
        return pl.BlockSpec(arr.shape, lambda i: (0,) * nd)

    in_specs = [pl.BlockSpec((tile_b, pdims[0]), lambda i: (i, 0))]
    in_specs += [resident(a) for a in wbs]
    out_spec = pl.BlockSpec((tile_b, pdims[-1]), lambda i: (i, 0))

    # Megacore sharding only pays when per-core work is substantial; with a
    # collapsed (size-1) grid use "arbitrary".
    sem = ("arbitrary",) if grid_b == 1 else ("parallel",)

    out_p = pl.pallas_call(
        mlp_kernel,
        out_shape=jax.ShapeDtypeStruct((B_p, pdims[-1]), jnp.float32),
        grid_spec=pltpu.PrefetchScalarGridSpec(
            num_scalar_prefetch=0,
            grid=(grid_b,),
            in_specs=in_specs,
            out_specs=out_spec,
        ),
        compiler_params=pltpu.CompilerParams(dimension_semantics=sem),
    )(x_p, *wbs)

    return out_p[:B, :d_out].astype(x.dtype)


def init_linear(key, fan_in, fan_out):
    """Deterministic init mimicking torch.nn.Linear defaults.

    Returns W already transposed to [in, out] and b as [1, out]."""
    kw, kb = jax.random.split(key)
    bound = 1.0 / jnp.sqrt(fan_in)
    w = jax.random.uniform(kw, (fan_in, fan_out), jnp.float32, -bound, bound)
    b = jax.random.uniform(kb, (1, fan_out), jnp.float32, -bound, bound)
    return w, b


def reference_forward(x, params, compute_dtype=jnp.float32):
    """Pure-JAX reference with the same dtype policy as the kernel."""
    h = x.astype(compute_dtype)
    for i, (w, b) in enumerate(params):
        h = jnp.dot(h, w.astype(compute_dtype),
                    preferred_element_type=jnp.float32) + b
        if i < len(params) - 1:
            h = jnp.maximum(h, 0.0).astype(compute_dtype)
    return h


if __name__ == "__main__":
    input_size = 32
    output_size = 8
    batch = 16

    key = jax.random.PRNGKey(0)
    k_x, k1, k2, k3, k4 = jax.random.split(key, 5)

    x = jax.random.normal(k_x, (batch, input_size), jnp.float32)
    params = [
        init_linear(k1, input_size, 2 * input_size),
        init_linear(k2, 2 * input_size, 2 * input_size),
        init_linear(k3, 2 * input_size, input_size),
        init_linear(k4, input_size, output_size),
    ]

    # f32 path (default; v5e-friendly) -- strict check vs f32 reference.
    out = jax.block_until_ready(baseline_forward(x, params))
    ref = reference_forward(x, params)
    assert out.shape == (batch, output_size)
    assert jnp.allclose(out, ref, atol=1e-5, rtol=1e-5), "f32 mismatch vs reference"

    # bf16 compute path (v6e/v7x MXU peak) -- check vs bf16-cast reference.
    out_bf16 = jax.block_until_ready(
        baseline_forward(x, params, compute_dtype=jnp.bfloat16))
    ref_bf16 = reference_forward(x, params, compute_dtype=jnp.bfloat16)
    assert out_bf16.shape == (batch, output_size)
    assert jnp.allclose(out_bf16, ref_bf16, atol=2e-2, rtol=2e-2), \
        "bf16 mismatch vs bf16 reference"

    print("KERNEL_OK")
</pallas_src>

<mosaic_0001>
module attributes {stable_mosaic.version = 11 : i64} {
  func.func @mlp_kernel(%arg0: i32, %arg1: memref<16x128xf32, #tpu.memory_space<vmem>>, %arg2: memref<128x128xf32, #tpu.memory_space<vmem>>, %arg3: memref<1x128xf32, #tpu.memory_space<vmem>>, %arg4: memref<128x128xf32, #tpu.memory_space<vmem>>, %arg5: memref<1x128xf32, #tpu.memory_space<vmem>>, %arg6: memref<128x128xf32, #tpu.memory_space<vmem>>, %arg7: memref<1x128xf32, #tpu.memory_space<vmem>>, %arg8: memref<128x128xf32, #tpu.memory_space<vmem>>, %arg9: memref<1x128xf32, #tpu.memory_space<vmem>>, %arg10: memref<16x128xf32, #tpu.memory_space<vmem>>) attributes {dimension_semantics = [#tpu.dimension_semantics<arbitrary>], iteration_bounds = array<i64: 1>, scalar_prefetch = 0 : i64, scratch_operands = 0 : i64, tpu.core_type = #tpu.core_type<tc>, window_params = [{transform_indices = @transform_0, window_bounds = array<i64: 16, 128>}, {pipeline_mode = #tpu.pipeline_mode<synchronous>, transform_indices = @transform_1, window_bounds = array<i64: 128, 128>}, {pipeline_mode = #tpu.pipeline_mode<synchronous>, transform_indices = @transform_2, window_bounds = array<i64: 1, 128>}, {pipeline_mode = #tpu.pipeline_mode<synchronous>, transform_indices = @transform_3, window_bounds = array<i64: 128, 128>}, {pipeline_mode = #tpu.pipeline_mode<synchronous>, transform_indices = @transform_4, window_bounds = array<i64: 1, 128>}, {pipeline_mode = #tpu.pipeline_mode<synchronous>, transform_indices = @transform_5, window_bounds = array<i64: 128, 128>}, {pipeline_mode = #tpu.pipeline_mode<synchronous>, transform_indices = @transform_6, window_bounds = array<i64: 1, 128>}, {pipeline_mode = #tpu.pipeline_mode<synchronous>, transform_indices = @transform_7, window_bounds = array<i64: 128, 128>}, {pipeline_mode = #tpu.pipeline_mode<synchronous>, transform_indices = @transform_8, window_bounds = array<i64: 1, 128>}, {transform_indices = @transform_9, window_bounds = array<i64: 16, 128>}]} {
    %c0 = arith.constant 0 : index
    %c0_0 = arith.constant 0 : index
    %0 = vector.load %arg1[%c0, %c0_0] : memref<16x128xf32, #tpu.memory_space<vmem>>, vector<16x128xf32>
    %c0_1 = arith.constant 0 : index
    %c0_2 = arith.constant 0 : index
    %1 = vector.load %arg2[%c0_1, %c0_2] : memref<128x128xf32, #tpu.memory_space<vmem>>, vector<128x128xf32>
    %cst = arith.constant dense<0.000000e+00> : vector<16x128xf32>
    %2 = tpu.matmul %0, %1, %cst {dimension_numbers = #tpu.dot_dimension_numbers<[1], [0], [0], [1], [0, 0, 1, 1], [], []>} : vector<16x128xf32>, vector<128x128xf32>, vector<16x128xf32> -> vector<16x128xf32>
    %c0_3 = arith.constant 0 : index
    %c0_4 = arith.constant 0 : index
    %3 = vector.load %arg3[%c0_3, %c0_4] : memref<1x128xf32, #tpu.memory_space<vmem>>, vector<1x128xf32>
    %4 = vector.broadcast %3 : vector<1x128xf32> to vector<16x128xf32>
    %5 = arith.addf %2, %4 : vector<16x128xf32>
    %cst_5 = arith.constant 0.000000e+00 : f32
    %6 = vector.broadcast %cst_5 : f32 to vector<16x128xf32>
    %7 = arith.maximumf %5, %6 : vector<16x128xf32>
    %c0_6 = arith.constant 0 : index
    %c0_7 = arith.constant 0 : index
    %8 = vector.load %arg4[%c0_6, %c0_7] : memref<128x128xf32, #tpu.memory_space<vmem>>, vector<128x128xf32>
    %cst_8 = arith.constant dense<0.000000e+00> : vector<16x128xf32>
    %9 = tpu.matmul %7, %8, %cst_8 {dimension_numbers = #tpu.dot_dimension_numbers<[1], [0], [0], [1], [0, 0, 1, 1], [], []>} : vector<16x128xf32>, vector<128x128xf32>, vector<16x128xf32> -> vector<16x128xf32>
    %c0_9 = arith.constant 0 : index
    %c0_10 = arith.constant 0 : index
    %10 = vector.load %arg5[%c0_9, %c0_10] : memref<1x128xf32, #tpu.memory_space<vmem>>, vector<1x128xf32>
    %11 = vector.broadcast %10 : vector<1x128xf32> to vector<16x128xf32>
    %12 = arith.addf %9, %11 : vector<16x128xf32>
    %cst_11 = arith.constant 0.000000e+00 : f32
    %13 = vector.broadcast %cst_11 : f32 to vector<16x128xf32>
    %14 = arith.maximumf %12, %13 : vector<16x128xf32>
    %c0_12 = arith.constant 0 : index
    %c0_13 = arith.constant 0 : index
    %15 = vector.load %arg6[%c0_12, %c0_13] : memref<128x128xf32, #tpu.memory_space<vmem>>, vector<128x128xf32>
    %cst_14 = arith.constant dense<0.000000e+00> : vector<16x128xf32>
    %16 = tpu.matmul %14, %15, %cst_14 {dimension_numbers = #tpu.dot_dimension_numbers<[1], [0], [0], [1], [0, 0, 1, 1], [], []>} : vector<16x128xf32>, vector<128x128xf32>, vector<16x128xf32> -> vector<16x128xf32>
    %c0_15 = arith.constant 0 : index
    %c0_16 = arith.constant 0 : index
    %17 = vector.load %arg7[%c0_15, %c0_16] : memref<1x128xf32, #tpu.memory_space<vmem>>, vector<1x128xf32>
    %18 = vector.broadcast %17 : vector<1x128xf32> to vector<16x128xf32>
    %19 = arith.addf %16, %18 : vector<16x128xf32>
    %cst_17 = arith.constant 0.000000e+00 : f32
    %20 = vector.broadcast %cst_17 : f32 to vector<16x128xf32>
    %21 = arith.maximumf %19, %20 : vector<16x128xf32>
    %c0_18 = arith.constant 0 : index
    %c0_19 = arith.constant 0 : index
    %22 = vector.load %arg8[%c0_18, %c0_19] : memref<128x128xf32, #tpu.memory_space<vmem>>, vector<128x128xf32>
    %cst_20 = arith.constant dense<0.000000e+00> : vector<16x128xf32>
    %23 = tpu.matmul %21, %22, %cst_20 {dimension_numbers = #tpu.dot_dimension_numbers<[1], [0], [0], [1], [0, 0, 1, 1], [], []>} : vector<16x128xf32>, vector<128x128xf32>, vector<16x128xf32> -> vector<16x128xf32>
    %c0_21 = arith.constant 0 : index
    %c0_22 = arith.constant 0 : index
    %24 = vector.load %arg9[%c0_21, %c0_22] : memref<1x128xf32, #tpu.memory_space<vmem>>, vector<1x128xf32>
    %25 = vector.broadcast %24 : vector<1x128xf32> to vector<16x128xf32>
    %26 = arith.addf %23, %25 : vector<16x128xf32>
    %c0_23 = arith.constant 0 : index
    %c0_24 = arith.constant 0 : index
    %27 = vector.load %arg10[%c0_23, %c0_24] : memref<16x128xf32, #tpu.memory_space<vmem>>, vector<16x128xf32>
    tpu.vector_store %arg10[%c0_23, %c0_24], %26 {strides = array<i32>} : memref<16x128xf32, #tpu.memory_space<vmem>>, vector<16x128xf32>,
    return
  }
  func.func @transform_0(%arg0: i32) -> (i32, i32) {
    %c0_i32 = arith.constant 0 : i32
    %c0_i32_0 = arith.constant 0 : i32
    return %arg0, %c0_i32 : i32, i32
  }
  func.func @transform_1(%arg0: i32) -> (i32, i32) {
    %c0_i32 = arith.constant 0 : i32
    %c0_i32_0 = arith.constant 0 : i32
    %c0_i32_1 = arith.constant 0 : i32
    return %c0_i32, %c0_i32_0 : i32, i32
  }
  func.func @transform_2(%arg0: i32) -> (i32, i32) {
    %c0_i32 = arith.constant 0 : i32
    %c0_i32_0 = arith.constant 0 : i32
    %c0_i32_1 = arith.constant 0 : i32
    return %c0_i32, %c0_i32_0 : i32, i32
  }
  func.func @transform_3(%arg0: i32) -> (i32, i32) {
    %c0_i32 = arith.constant 0 : i32
    %c0_i32_0 = arith.constant 0 : i32
    %c0_i32_1 = arith.constant 0 : i32
    return %c0_i32, %c0_i32_0 : i32, i32
  }
  func.func @transform_4(%arg0: i32) -> (i32, i32) {
    %c0_i32 = arith.constant 0 : i32
    %c0_i32_0 = arith.constant 0 : i32
    %c0_i32_1 = arith.constant 0 : i32
    return %c0_i32, %c0_i32_0 : i32, i32
  }
  func.func @transform_5(%arg0: i32) -> (i32, i32) {
    %c0_i32 = arith.constant 0 : i32
    %c0_i32_0 = arith.constant 0 : i32
    %c0_i32_1 = arith.constant 0 : i32
    return %c0_i32, %c0_i32_0 : i32, i32
  }
  func.func @transform_6(%arg0: i32) -> (i32, i32) {
    %c0_i32 = arith.constant 0 : i32
    %c0_i32_0 = arith.constant 0 : i32
    %c0_i32_1 = arith.constant 0 : i32
    return %c0_i32, %c0_i32_0 : i32, i32
  }
  func.func @transform_7(%arg0: i32) -> (i32, i32) {
    %c0_i32 = arith.constant 0 : i32
    %c0_i32_0 = arith.constant 0 : i32
    %c0_i32_1 = arith.constant 0 : i32
    return %c0_i32, %c0_i32_0 : i32, i32
  }
  func.func @transform_8(%arg0: i32) -> (i32, i32) {
    %c0_i32 = arith.constant 0 : i32
    %c0_i32_0 = arith.constant 0 : i32
    %c0_i32_1 = arith.constant 0 : i32
    return %c0_i32, %c0_i32_0 : i32, i32
  }
  func.func @transform_9(%arg0: i32) -> (i32, i32) {
    %c0_i32 = arith.constant 0 : i32
    %c0_i32_0 = arith.constant 0 : i32
    return %arg0, %c0_i32 : i32, i32
  }
}

</mosaic_0001>

<llo_original>
// kernel: tpu_custom_call.1
$region0: #{tpu_custom_call.1}
  #allocation0 [shape = 'u32[]', space=smem, size = 0x4, offset = 0x4, fixed_abs, tag = 'smem constant byte address 0x4 - core index']
  #allocation1 [shape = 'u32[144,128]{1,0:T(1,128)}', space=vmem, size = 0x12000, scoped, tag = 'internal scratch']
  %s0 = inlined_call_operand.hbm [shape: f32[16,128], index: 0, kind: input, shape index: {}]
  %s1 = inlined_call_operand.hbm [shape: f32[128,128], index: 1, kind: input, shape index: {}]
  %s2 = inlined_call_operand.vmem [shape: f32[1,128], index: 2, kind: input, shape index: {}]
  %s3 = inlined_call_operand.hbm [shape: f32[128,128], index: 3, kind: input, shape index: {}]
  %s4 = inlined_call_operand.vmem [shape: f32[1,128], index: 4, kind: input, shape index: {}]
  %s5 = inlined_call_operand.hbm [shape: f32[128,128], index: 5, kind: input, shape index: {}]
  %s6 = inlined_call_operand.vmem [shape: f32[1,128], index: 6, kind: input, shape index: {}]
  %s7 = inlined_call_operand.hbm [shape: f32[128,128], index: 7, kind: input, shape index: {}]
  %s8 = inlined_call_operand.vmem [shape: f32[1,128], index: 8, kind: input, shape index: {}]
  %s9 = inlined_call_operand.hbm [shape: f32[16,128], index: 9, kind: output, shape index: {}]
  %s10 = sld [smem:[#allocation0]]
  $region66: #{tpu_custom_call.1} parent=0
    _
  %s12 = ssub.s32 1, %s10
  %s13 = scalar_select 0, %s12, %s10
  $region1: #{tpu_custom_call.1} parent=0
    #allocation2 [shape = 'u8[8192]{0}', space=vmem, size = 0x2000, scoped, tag = 'input window, operand 0, single buffered']
    #allocation3 [shape = 's32[1]{0}', space=sflag, size = 0x4, scoped, tag = 'scoped memory for tpu_custom_call.1']
    #allocation4 [shape = 's32[1]{0}', space=sflag, size = 0x4, scoped, tag = 'scoped memory for tpu_custom_call.1']
    #allocation5 [shape = 'u8[65536]{0}', space=vmem, size = 0x10000, scoped, tag = 'input window, operand 1, single buffered']
    #allocation6 [shape = 's32[1]{0}', space=sflag, size = 0x4, scoped, tag = 'scoped memory for tpu_custom_call.1']
    #allocation7 [shape = 'u8[65536]{0}', space=vmem, size = 0x10000, scoped, tag = 'input window, operand 3, single buffered']
    #allocation8 [shape = 'u8[65536]{0}', space=vmem, size = 0x10000, scoped, tag = 'input window, operand 5, single buffered']
    #allocation9 [shape = 's32[1]{0}', space=sflag, size = 0x4, scoped, tag = 'scoped memory for tpu_custom_call.1']
    #allocation10 [shape = 'u8[65536]{0}', space=vmem, size = 0x10000, scoped, tag = 'input window, operand 7, single buffered']
    #allocation11 [shape = 'u8[8192]{0}', space=vmem, size = 0x2000, scoped, tag = 'output window, operand 0, single buffered']
    %14 = vsyncpa [#allocation3], 0
    %15 = vsyncpa [#allocation6], 0
    %16 = vsyncpa [#allocation9], 0
    %17 = vsyncpa [#allocation4], 0
    // Predicated region
    $region2: #{tpu_custom_call.1} parent=1 // pred_check
      _
    $region3: #{tpu_custom_call.1} parent=1 // pred_check_branch
      %19 = sbr.rel (0) target = $region5
    $region4: #{tpu_custom_call.1} parent=1 // pred_region
      %s21 = ssub.s32 256, 256
      %22 = vsyncadd [#allocation3], %s21
      %s23 = sshll.u32 [#allocation2], 4
      %s24 = int_to_ptr.vmem [resolvable:$true] %s23
      %29 = dma.hbm_to_vmem [thread:$0]  %s0, 256, %s24, [#allocation3], 128, 128, 8
    $region5: #{tpu_custom_call.1} parent=1 // pred_fallthru
      _
    // Predicated region
    $region6: #{tpu_custom_call.1} parent=1 // pred_check
      _
    $region7: #{tpu_custom_call.1} parent=1 // pred_check_branch
      %31 = sbr.rel (0) target = $region9
    $region8: #{tpu_custom_call.1} parent=1 // pred_region
      %s33 = ssub.s32 2048, 2048
      %34 = vsyncadd [#allocation6], %s33
      %s35 = sshll.u32 [#allocation5], 4
      %s36 = int_to_ptr.vmem [resolvable:$true] %s35
      %41 = dma.hbm_to_vmem [thread:$0]  %s1, 2048, %s36, [#allocation6], 128, 128, 8
    $region9: #{tpu_custom_call.1} parent=1 // pred_fallthru
      _
    // Predicated region
    $region10: #{tpu_custom_call.1} parent=1 // pred_check
      _
    $region11: #{tpu_custom_call.1} parent=1 // pred_check_branch
      %43 = sbr.rel (0) target = $region13
    $region12: #{tpu_custom_call.1} parent=1 // pred_region
      _
    $region13: #{tpu_custom_call.1} parent=1 // pred_fallthru
      _
    // Predicated region
    $region14: #{tpu_custom_call.1} parent=1 // pred_check
      _
    $region15: #{tpu_custom_call.1} parent=1 // pred_check_branch
      %45 = sbr.rel (0) target = $region17
    $region16: #{tpu_custom_call.1} parent=1 // pred_region
      %s47 = ssub.s32 2048, 2048
      %48 = vsyncadd [#allocation6], %s47
      %s49 = sshll.u32 [#allocation7], 4
      %s50 = int_to_ptr.vmem [resolvable:$true] %s49
      %55 = dma.hbm_to_vmem [thread:$0]  %s3, 2048, %s50, [#allocation6], 128, 128, 8
    $region17: #{tpu_custom_call.1} parent=1 // pred_fallthru
      _
    // Predicated region
    $region18: #{tpu_custom_call.1} parent=1 // pred_check
      _
    $region19: #{tpu_custom_call.1} parent=1 // pred_check_branch
      %57 = sbr.rel (0) target = $region21
    $region20: #{tpu_custom_call.1} parent=1 // pred_region
      _
    $region21: #{tpu_custom_call.1} parent=1 // pred_fallthru
      _
    // Predicated region
    $region22: #{tpu_custom_call.1} parent=1 // pred_check
      _
    $region23: #{tpu_custom_call.1} parent=1 // pred_check_branch
      %59 = sbr.rel (0) target = $region25
    $region24: #{tpu_custom_call.1} parent=1 // pred_region
      %s61 = ssub.s32 2048, 2048
      %62 = vsyncadd [#allocation9], %s61
      %s63 = sshll.u32 [#allocation8], 4
      %s64 = int_to_ptr.vmem [resolvable:$true] %s63
      %69 = dma.hbm_to_vmem [thread:$0]  %s5, 2048, %s64, [#allocation9], 128, 128, 8
    $region25: #{tpu_custom_call.1} parent=1 // pred_fallthru
      _
    // Predicated region
    $region26: #{tpu_custom_call.1} parent=1 // pred_check
      _
    $region27: #{tpu_custom_call.1} parent=1 // pred_check_branch
      %71 = sbr.rel (0) target = $region29
    $region28: #{tpu_custom_call.1} parent=1 // pred_region
      _
    $region29: #{tpu_custom_call.1} parent=1 // pred_fallthru
      _
    // Predicated region
    $region30: #{tpu_custom_call.1} parent=1 // pred_check
      _
    $region31: #{tpu_custom_call.1} parent=1 // pred_check_branch
      %73 = sbr.rel (0) target = $region33
    $region32: #{tpu_custom_call.1} parent=1 // pred_region
      %s75 = ssub.s32 2048, 2048
      %76 = vsyncadd [#allocation9], %s75
      %s77 = sshll.u32 [#allocation10], 4
      %s78 = int_to_ptr.vmem [resolvable:$true] %s77
      %83 = dma.hbm_to_vmem [thread:$0]  %s7, 2048, %s78, [#allocation9], 128, 128, 8
    $region33: #{tpu_custom_call.1} parent=1 // pred_fallthru
      _
    // Predicated region
    $region34: #{tpu_custom_call.1} parent=1 // pred_check
      _
    $region35: #{tpu_custom_call.1} parent=1 // pred_check_branch
      %85 = sbr.rel (0) target = $region37
    $region36: #{tpu_custom_call.1} parent=1 // pred_region
      _
    $region37: #{tpu_custom_call.1} parent=1 // pred_fallthru
      _
    // Predicated region
    $region38: #{tpu_custom_call.1} parent=1 // pred_check
      _
    $region39: #{tpu_custom_call.1} parent=1 // pred_check_branch
      %87 = sbr.rel (0) target = $region41
    $region40: #{tpu_custom_call.1} parent=1 // pred_region
      %88 = dma.done [#allocation3], 256
    $region41: #{tpu_custom_call.1} parent=1 // pred_fallthru
      _
    // Predicated region
    $region42: #{tpu_custom_call.1} parent=1 // pred_check
      _
    $region43: #{tpu_custom_call.1} parent=1 // pred_check_branch
      %90 = sbr.rel (0) target = $region45
    $region44: #{tpu_custom_call.1} parent=1 // pred_region
      %91 = dma.done [#allocation6], 2048
    $region45: #{tpu_custom_call.1} parent=1 // pred_fallthru
      _
    // Predicated region
    $region46: #{tpu_custom_call.1} parent=1 // pred_check
      _
    $region47: #{tpu_custom_call.1} parent=1 // pred_check_branch
      %93 = sbr.rel (0) target = $region49
    $region48: #{tpu_custom_call.1} parent=1 // pred_region
      %94 = dma.done [#allocation6], 2048
    $region49: #{tpu_custom_call.1} parent=1 // pred_fallthru
      _
    // Predicated region
    $region50: #{tpu_custom_call.1} parent=1 // pred_check
      _
    $region51: #{tpu_custom_call.1} parent=1 // pred_check_branch
      %96 = sbr.rel (0) target = $region53
    $region52: #{tpu_custom_call.1} parent=1 // pred_region
      %97 = dma.done [#allocation9], 2048
    $region53: #{tpu_custom_call.1} parent=1 // pred_fallthru
      _
    // Predicated region
    $region54: #{tpu_custom_call.1} parent=1 // pred_check
      _
    $region55: #{tpu_custom_call.1} parent=1 // pred_check_branch
      %99 = sbr.rel (0) target = $region57
    $region56: #{tpu_custom_call.1} parent=1 // pred_region
      %100 = dma.done [#allocation9], 2048
    $region57: #{tpu_custom_call.1} parent=1 // pred_fallthru
      _
    %v101 = vld [vmem:[#allocation2] sm:$0xff]
    %v102 = vld [vmem:[#allocation2 + $0x8] sm:$0xff]
    %v103 = vld [vmem:[#allocation5] sm:$0xff]
    %v104 = vld [vmem:[#allocation5 + $0x8] sm:$0xff]
    %v105 = vld [vmem:[#allocation5 + $0x10] sm:$0xff]
    %v106 = vld [vmem:[#allocation5 + $0x18] sm:$0xff]
    %v107 = vld [vmem:[#allocation5 + $0x20] sm:$0xff]
    %v108 = vld [vmem:[#allocation5 + $0x28] sm:$0xff]
    %v109 = vld [vmem:[#allocation5 + $0x30] sm:$0xff]
    %v110 = vld [vmem:[#allocation5 + $0x38] sm:$0xff]
    %v111 = vld [vmem:[#allocation5 + $0x40] sm:$0xff]
    %v112 = vld [vmem:[#allocation5 + $0x48] sm:$0xff]
    %v113 = vld [vmem:[#allocation5 + $0x50] sm:$0xff]
    %v114 = vld [vmem:[#allocation5 + $0x58] sm:$0xff]
    %v115 = vld [vmem:[#allocation5 + $0x60] sm:$0xff]
    %v116 = vld [vmem:[#allocation5 + $0x68] sm:$0xff]
    %v117 = vld [vmem:[#allocation5 + $0x70] sm:$0xff]
    %v118 = vld [vmem:[#allocation5 + $0x78] sm:$0xff]
    %v119 = vld [vmem:[%s2] sm:$0x1]
    %v121 = vlaneseq
    %v122 = vshrl.u32 %v121, 7
    %v123 = vsub.s32 0, %v122
    %v124 = vrot.slane %v119, %v123
    %126 = vmatprep.subr.mxu0 0.0
    %127 = vmatpush1.msra.mxu0 %v103
    %128 = vmatprep.subr.mxu0 0.0
    %129 = vmatpush1.msra.mxu0 %v104
    %130 = vmatprep.subr.mxu0 0.0
    %131 = vmatpush1.msra.mxu0 %v105
    %132 = vmatprep.subr.mxu0 0.0
    %133 = vmatpush1.msra.mxu0 %v106
    %134 = vmatprep.subr.mxu0 0.0
    %135 = vmatpush1.msra.mxu0 %v107
    %136 = vmatprep.subr.mxu0 0.0
    %137 = vmatpush1.msra.mxu0 %v108
    %138 = vmatprep.subr.mxu0 0.0
    %139 = vmatpush1.msra.mxu0 %v109
    %140 = vmatprep.subr.mxu0 0.0
    %141 = vmatpush1.msra.mxu0 %v110
    %142 = vmatprep.subr.mxu0 0.0
    %143 = vmatpush1.msra.mxu0 %v111
    %144 = vmatprep.subr.mxu0 0.0
    %145 = vmatpush1.msra.mxu0 %v112
    %146 = vmatprep.subr.mxu0 0.0
    %147 = vmatpush1.msra.mxu0 %v113
    %148 = vmatprep.subr.mxu0 0.0
    %149 = vmatpush1.msra.mxu0 %v114
    %150 = vmatprep.subr.mxu0 0.0
    %151 = vmatpush1.msra.mxu0 %v115
    %152 = vmatprep.subr.mxu0 0.0
    %153 = vmatpush1.msra.mxu0 %v116
    %154 = vmatprep.subr.mxu0 0.0
    %155 = vmatpush1.msra.mxu0 %v117
    %156 = vmatprep.subr.mxu0 0.0
    %157 = vmatpush1.msra.mxu0 %v118
    %158 = vmatprep.subr.mxu0 0.0
    %159 = vmatpush1.msra.mxu0 0.0
    %160 = vmatprep.subr.mxu0 0.0
    %161 = vmatpush1.msra.mxu0 0.0
    %162 = vmatprep.subr.mxu0 0.0
    %163 = vmatpush1.msra.mxu0 0.0
    %164 = vmatprep.subr.mxu0 0.0
    %165 = vmatpush1.msra.mxu0 0.0
    %166 = vmatprep.subr.mxu0 0.0
    %167 = vmatpush1.msra.mxu0 0.0
    %168 = vmatprep.subr.mxu0 0.0
    %169 = vmatpush1.msra.mxu0 0.0
    %170 = vmatprep.subr.mxu0 0.0
    %171 = vmatpush1.msra.mxu0 0.0
    %172 = vmatprep.subr.mxu0 0.0
    %173 = vmatpush1.msra.mxu0 0.0
    %174 = vmatprep.subr.mxu0 0.0
    %175 = vmatpush1.msra.mxu0 0.0
    %176 = vmatprep.subr.mxu0 0.0
    %177 = vmatpush1.msra.mxu0 0.0
    %178 = vmatprep.subr.mxu0 0.0
    %179 = vmatpush1.msra.mxu0 0.0
    %180 = vmatprep.subr.mxu0 0.0
    %181 = vmatpush1.msra.mxu0 0.0
    %182 = vmatprep.subr.mxu0 0.0
    %183 = vmatpush1.msra.mxu0 0.0
    %184 = vmatprep.subr.mxu0 0.0
    %185 = vmatpush1.msra.mxu0 0.0
    %186 = vmatprep.subr.mxu0 0.0
    %187 = vmatpush1.msra.mxu0 0.0
    %188 = vmatprep.subr.mxu0 0.0
    %189 = vmatpush1.msra.mxu0 0.0
    %190 = vmatprep.mubr.f32.mxu0 0.0
    %191 = vmatmul.mubr.f32.gmra.mrb[0].mxu0 %v101
    %v192 = vpop.f32.mrb[0].mxu0
    %v193 = vadd.f32 %v124, %v192
    %v194 = vpop.f32.mrb[0].mxu0
    %195 = vmatprep.mubr.f32.mxu0 0.0
    %196 = vmatmul.mubr.f32.gmra.mrb[0].mxu0 %v102
    %v197 = vpop.f32.mrb[0].mxu0
    %v198 = vadd.f32 %v124, %v197
    %v199 = vpop.f32.mrb[0].mxu0
    %200 = vdwg.mxu0
    %v201 = vmax.f32 %v193, 0.0
    %v202 = vmax.f32 %v198, 0.0
    %v203 = vld [vmem:[#allocation7] sm:$0xff]
    %v204 = vld [vmem:[#allocation7 + $0x8] sm:$0xff]
    %v205 = vld [vmem:[#allocation7 + $0x10] sm:$0xff]
    %v206 = vld [vmem:[#allocation7 + $0x18] sm:$0xff]
    %v207 = vld [vmem:[#allocation7 + $0x20] sm:$0xff]
    %v208 = vld [vmem:[#allocation7 + $0x28] sm:$0xff]
    %v209 = vld [vmem:[#allocation7 + $0x30] sm:$0xff]
    %v210 = vld [vmem:[#allocation7 + $0x38] sm:$0xff]
    %v211 = vld [vmem:[#allocation7 + $0x40] sm:$0xff]
    %v212 = vld [vmem:[#allocation7 + $0x48] sm:$0xff]
    %v213 = vld [vmem:[#allocation7 + $0x50] sm:$0xff]
    %v214 = vld [vmem:[#allocation7 + $0x58] sm:$0xff]
    %v215 = vld [vmem:[#allocation7 + $0x60] sm:$0xff]
    %v216 = vld [vmem:[#allocation7 + $0x68] sm:$0xff]
    %v217 = vld [vmem:[#allocation7 + $0x70] sm:$0xff]
    %v218 = vld [vmem:[#allocation7 + $0x78] sm:$0xff]
    %v219 = vld [vmem:[%s4] sm:$0x1]
    %v221 = vlaneseq
    %v222 = vshrl.u32 %v221, 7
    %v223 = vsub.s32 0, %v222
    %v224 = vrot.slane %v219, %v223
    %226 = vmatprep.subr.mxu0 0.0
    %227 = vmatpush1.msra.mxu0 %v203
    %228 = vmatprep.subr.mxu0 0.0
    %229 = vmatpush1.msra.mxu0 %v204
    %230 = vmatprep.subr.mxu0 0.0
    %231 = vmatpush1.msra.mxu0 %v205
    %232 = vmatprep.subr.mxu0 0.0
    %233 = vmatpush1.msra.mxu0 %v206
    %234 = vmatprep.subr.mxu0 0.0
    %235 = vmatpush1.msra.mxu0 %v207
    %236 = vmatprep.subr.mxu0 0.0
    %237 = vmatpush1.msra.mxu0 %v208
    %238 = vmatprep.subr.mxu0 0.0
    %239 = vmatpush1.msra.mxu0 %v209
    %240 = vmatprep.subr.mxu0 0.0
    %241 = vmatpush1.msra.mxu0 %v210
    %242 = vmatprep.subr.mxu0 0.0
    %243 = vmatpush1.msra.mxu0 %v211
    %244 = vmatprep.subr.mxu0 0.0
    %245 = vmatpush1.msra.mxu0 %v212
    %246 = vmatprep.subr.mxu0 0.0
    %247 = vmatpush1.msra.mxu0 %v213
    %248 = vmatprep.subr.mxu0 0.0
    %249 = vmatpush1.msra.mxu0 %v214
    %250 = vmatprep.subr.mxu0 0.0
    %251 = vmatpush1.msra.mxu0 %v215
    %252 = vmatprep.subr.mxu0 0.0
    %253 = vmatpush1.msra.mxu0 %v216
    %254 = vmatprep.subr.mxu0 0.0
    %255 = vmatpush1.msra.mxu0 %v217
    %256 = vmatprep.subr.mxu0 0.0
    %257 = vmatpush1.msra.mxu0 %v218
    %258 = vmatprep.subr.mxu0 0.0
    %259 = vmatpush1.msra.mxu0 0.0
    %260 = vmatprep.subr.mxu0 0.0
    %261 = vmatpush1.msra.mxu0 0.0
    %262 = vmatprep.subr.mxu0 0.0
    %263 = vmatpush1.msra.mxu0 0.0
    %264 = vmatprep.subr.mxu0 0.0
    %265 = vmatpush1.msra.mxu0 0.0
    %266 = vmatprep.subr.mxu0 0.0
    %267 = vmatpush1.msra.mxu0 0.0
    %268 = vmatprep.subr.mxu0 0.0
    %269 = vmatpush1.msra.mxu0 0.0
    %270 = vmatprep.subr.mxu0 0.0
    %271 = vmatpush1.msra.mxu0 0.0
    %272 = vmatprep.subr.mxu0 0.0
    %273 = vmatpush1.msra.mxu0 0.0
    %274 = vmatprep.subr.mxu0 0.0
    %275 = vmatpush1.msra.mxu0 0.0
    %276 = vmatprep.subr.mxu0 0.0
    %277 = vmatpush1.msra.mxu0 0.0
    %278 = vmatprep.subr.mxu0 0.0
    %279 = vmatpush1.msra.mxu0 0.0
    %280 = vmatprep.subr.mxu0 0.0
    %281 = vmatpush1.msra.mxu0 0.0
    %282 = vmatprep.subr.mxu0 0.0
    %283 = vmatpush1.msra.mxu0 0.0
    %284 = vmatprep.subr.mxu0 0.0
    %285 = vmatpush1.msra.mxu0 0.0
    %286 = vmatprep.subr.mxu0 0.0
    %287 = vmatpush1.msra.mxu0 0.0
    %288 = vmatprep.subr.mxu0 0.0
    %289 = vmatpush1.msra.mxu0 0.0
    %290 = vmatprep.mubr.f32.mxu0 0.0
    %291 = vmatmul.mubr.f32.gmra.mrb[0].mxu0 %v201
    %v292 = vpop.f32.mrb[0].mxu0
    %v293 = vadd.f32 %v224, %v292
    %v294 = vpop.f32.mrb[0].mxu0
    %295 = vmatprep.mubr.f32.mxu0 0.0
    %296 = vmatmul.mubr.f32.gmra.mrb[0].mxu0 %v202
    %v297 = vpop.f32.mrb[0].mxu0
    %v298 = vadd.f32 %v224, %v297
    %v299 = vpop.f32.mrb[0].mxu0
    %300 = vdwg.mxu0
    %v301 = vmax.f32 %v293, 0.0
    %v302 = vmax.f32 %v298, 0.0
    %v303 = vld [vmem:[#allocation8] sm:$0xff]
    %v304 = vld [vmem:[#allocation8 + $0x8] sm:$0xff]
    %v305 = vld [vmem:[#allocation8 + $0x10] sm:$0xff]
    %v306 = vld [vmem:[#allocation8 + $0x18] sm:$0xff]
    %v307 = vld [vmem:[#allocation8 + $0x20] sm:$0xff]
    %v308 = vld [vmem:[#allocation8 + $0x28] sm:$0xff]
    %v309 = vld [vmem:[#allocation8 + $0x30] sm:$0xff]
    %v310 = vld [vmem:[#allocation8 + $0x38] sm:$0xff]
    %v311 = vld [vmem:[#allocation8 + $0x40] sm:$0xff]
    %v312 = vld [vmem:[#allocation8 + $0x48] sm:$0xff]
    %v313 = vld [vmem:[#allocation8 + $0x50] sm:$0xff]
    %v314 = vld [vmem:[#allocation8 + $0x58] sm:$0xff]
    %v315 = vld [vmem:[#allocation8 + $0x60] sm:$0xff]
    %v316 = vld [vmem:[#allocation8 + $0x68] sm:$0xff]
    %v317 = vld [vmem:[#allocation8 + $0x70] sm:$0xff]
    %v318 = vld [vmem:[#allocation8 + $0x78] sm:$0xff]
    %v319 = vld [vmem:[%s6] sm:$0x1]
    %v321 = vlaneseq
    %v322 = vshrl.u32 %v321, 7
    %v323 = vsub.s32 0, %v322
    %v324 = vrot.slane %v319, %v323
    %326 = vmatprep.subr.mxu0 0.0
    %327 = vmatpush1.msra.mxu0 %v303
    %328 = vmatprep.subr.mxu0 0.0
    %329 = vmatpush1.msra.mxu0 %v304
    %330 = vmatprep.subr.mxu0 0.0
    %331 = vmatpush1.msra.mxu0 %v305
    %332 = vmatprep.subr.mxu0 0.0
    %333 = vmatpush1.msra.mxu0 %v306
    %334 = vmatprep.subr.mxu0 0.0
    %335 = vmatpush1.msra.mxu0 %v307
    %336 = vmatprep.subr.mxu0 0.0
    %337 = vmatpush1.msra.mxu0 %v308
    %338 = vmatprep.subr.mxu0 0.0
    %339 = vmatpush1.msra.mxu0 %v309
    %340 = vmatprep.subr.mxu0 0.0
    %341 = vmatpush1.msra.mxu0 %v310
    %342 = vmatprep.subr.mxu0 0.0
    %343 = vmatpush1.msra.mxu0 %v311
    %344 = vmatprep.subr.mxu0 0.0
    %345 = vmatpush1.msra.mxu0 %v312
    %346 = vmatprep.subr.mxu0 0.0
    %347 = vmatpush1.msra.mxu0 %v313
    %348 = vmatprep.subr.mxu0 0.0
    %349 = vmatpush1.msra.mxu0 %v314
    %350 = vmatprep.subr.mxu0 0.0
    %351 = vmatpush1.msra.mxu0 %v315
    %352 = vmatprep.subr.mxu0 0.0
    %353 = vmatpush1.msra.mxu0 %v316
    %354 = vmatprep.subr.mxu0 0.0
    %355 = vmatpush1.msra.mxu0 %v317
    %356 = vmatprep.subr.mxu0 0.0
    %357 = vmatpush1.msra.mxu0 %v318
    %358 = vmatprep.subr.mxu0 0.0
    %359 = vmatpush1.msra.mxu0 0.0
    %360 = vmatprep.subr.mxu0 0.0
    %361 = vmatpush1.msra.mxu0 0.0
    %362 = vmatprep.subr.mxu0 0.0
    %363 = vmatpush1.msra.mxu0 0.0
    %364 = vmatprep.subr.mxu0 0.0
    %365 = vmatpush1.msra.mxu0 0.0
    %366 = vmatprep.subr.mxu0 0.0
    %367 = vmatpush1.msra.mxu0 0.0
    %368 = vmatprep.subr.mxu0 0.0
    %369 = vmatpush1.msra.mxu0 0.0
    %370 = vmatprep.subr.mxu0 0.0
    %371 = vmatpush1.msra.mxu0 0.0
    %372 = vmatprep.subr.mxu0 0.0
    %373 = vmatpush1.msra.mxu0 0.0
    %374 = vmatprep.subr.mxu0 0.0
    %375 = vmatpush1.msra.mxu0 0.0
    %376 = vmatprep.subr.mxu0 0.0
    %377 = vmatpush1.msra.mxu0 0.0
    %378 = vmatprep.subr.mxu0 0.0
    %379 = vmatpush1.msra.mxu0 0.0
    %380 = vmatprep.subr.mxu0 0.0
    %381 = vmatpush1.msra.mxu0 0.0
    %382 = vmatprep.subr.mxu0 0.0
    %383 = vmatpush1.msra.mxu0 0.0
    %384 = vmatprep.subr.mxu0 0.0
    %385 = vmatpush1.msra.mxu0 0.0
    %386 = vmatprep.subr.mxu0 0.0
    %387 = vmatpush1.msra.mxu0 0.0
    %388 = vmatprep.subr.mxu0 0.0
    %389 = vmatpush1.msra.mxu0 0.0
    %390 = vmatprep.mubr.f32.mxu0 0.0
    %391 = vmatmul.mubr.f32.gmra.mrb[0].mxu0 %v301
    %v392 = vpop.f32.mrb[0].mxu0
    %v393 = vadd.f32 %v324, %v392
    %v394 = vpop.f32.mrb[0].mxu0
    %395 = vmatprep.mubr.f32.mxu0 0.0
    %396 = vmatmul.mubr.f32.gmra.mrb[0].mxu0 %v302
    %v397 = vpop.f32.mrb[0].mxu0
    %v398 = vadd.f32 %v324, %v397
    %v399 = vpop.f32.mrb[0].mxu0
    %400 = vdwg.mxu0
    %v401 = vmax.f32 %v393, 0.0
    %v402 = vmax.f32 %v398, 0.0
    %v403 = vld [vmem:[#allocation10] sm:$0xff]
    %v404 = vld [vmem:[#allocation10 + $0x8] sm:$0xff]
    %v405 = vld [vmem:[#allocation10 + $0x10] sm:$0xff]
    %v406 = vld [vmem:[#allocation10 + $0x18] sm:$0xff]
    %v407 = vld [vmem:[#allocation10 + $0x20] sm:$0xff]
    %v408 = vld [vmem:[#allocation10 + $0x28] sm:$0xff]
    %v409 = vld [vmem:[#allocation10 + $0x30] sm:$0xff]
    %v410 = vld [vmem:[#allocation10 + $0x38] sm:$0xff]
    %v411 = vld [vmem:[#allocation10 + $0x40] sm:$0xff]
    %v412 = vld [vmem:[#allocation10 + $0x48] sm:$0xff]
    %v413 = vld [vmem:[#allocation10 + $0x50] sm:$0xff]
    %v414 = vld [vmem:[#allocation10 + $0x58] sm:$0xff]
    %v415 = vld [vmem:[#allocation10 + $0x60] sm:$0xff]
    %v416 = vld [vmem:[#allocation10 + $0x68] sm:$0xff]
    %v417 = vld [vmem:[#allocation10 + $0x70] sm:$0xff]
    %v418 = vld [vmem:[#allocation10 + $0x78] sm:$0xff]
    %v419 = vld [vmem:[%s8] sm:$0x1]
    %v421 = vlaneseq
    %v422 = vshrl.u32 %v421, 7
    %v423 = vsub.s32 0, %v422
    %v424 = vrot.slane %v419, %v423
    %426 = vmatprep.subr.mxu0 0.0
    %427 = vmatpush1.msra.mxu0 %v403
    %428 = vmatprep.subr.mxu0 0.0
    %429 = vmatpush1.msra.mxu0 %v404
    %430 = vmatprep.subr.mxu0 0.0
    %431 = vmatpush1.msra.mxu0 %v405
    %432 = vmatprep.subr.mxu0 0.0
    %433 = vmatpush1.msra.mxu0 %v406
    %434 = vmatprep.subr.mxu0 0.0
    %435 = vmatpush1.msra.mxu0 %v407
    %436 = vmatprep.subr.mxu0 0.0
    %437 = vmatpush1.msra.mxu0 %v408
    %438 = vmatprep.subr.mxu0 0.0
    %439 = vmatpush1.msra.mxu0 %v409
    %440 = vmatprep.subr.mxu0 0.0
    %441 = vmatpush1.msra.mxu0 %v410
    %442 = vmatprep.subr.mxu0 0.0
    %443 = vmatpush1.msra.mxu0 %v411
    %444 = vmatprep.subr.mxu0 0.0
    %445 = vmatpush1.msra.mxu0 %v412
    %446 = vmatprep.subr.mxu0 0.0
    %447 = vmatpush1.msra.mxu0 %v413
    %448 = vmatprep.subr.mxu0 0.0
    %449 = vmatpush1.msra.mxu0 %v414
    %450 = vmatprep.subr.mxu0 0.0
    %451 = vmatpush1.msra.mxu0 %v415
    %452 = vmatprep.subr.mxu0 0.0
    %453 = vmatpush1.msra.mxu0 %v416
    %454 = vmatprep.subr.mxu0 0.0
    %455 = vmatpush1.msra.mxu0 %v417
    %456 = vmatprep.subr.mxu0 0.0
    %457 = vmatpush1.msra.mxu0 %v418
    %458 = vmatprep.subr.mxu0 0.0
    %459 = vmatpush1.msra.mxu0 0.0
    %460 = vmatprep.subr.mxu0 0.0
    %461 = vmatpush1.msra.mxu0 0.0
    %462 = vmatprep.subr.mxu0 0.0
    %463 = vmatpush1.msra.mxu0 0.0
    %464 = vmatprep.subr.mxu0 0.0
    %465 = vmatpush1.msra.mxu0 0.0
    %466 = vmatprep.subr.mxu0 0.0
    %467 = vmatpush1.msra.mxu0 0.0
    %468 = vmatprep.subr.mxu0 0.0
    %469 = vmatpush1.msra.mxu0 0.0
    %470 = vmatprep.subr.mxu0 0.0
    %471 = vmatpush1.msra.mxu0 0.0
    %472 = vmatprep.subr.mxu0 0.0
    %473 = vmatpush1.msra.mxu0 0.0
    %474 = vmatprep.subr.mxu0 0.0
    %475 = vmatpush1.msra.mxu0 0.0
    %476 = vmatprep.subr.mxu0 0.0
    %477 = vmatpush1.msra.mxu0 0.0
    %478 = vmatprep.subr.mxu0 0.0
    %479 = vmatpush1.msra.mxu0 0.0
    %480 = vmatprep.subr.mxu0 0.0
    %481 = vmatpush1.msra.mxu0 0.0
    %482 = vmatprep.subr.mxu0 0.0
    %483 = vmatpush1.msra.mxu0 0.0
    %484 = vmatprep.subr.mxu0 0.0
    %485 = vmatpush1.msra.mxu0 0.0
    %486 = vmatprep.subr.mxu0 0.0
    %487 = vmatpush1.msra.mxu0 0.0
    %488 = vmatprep.subr.mxu0 0.0
    %489 = vmatpush1.msra.mxu0 0.0
    %490 = vmatprep.mubr.f32.mxu0 0.0
    %491 = vmatmul.mubr.f32.gmra.mrb[0].mxu0 %v401
    %v492 = vpop.f32.mrb[0].mxu0
    %v493 = vadd.f32 %v424, %v492
    %v494 = vpop.f32.mrb[0].mxu0
    %495 = vmatprep.mubr.f32.mxu0 0.0
    %496 = vmatmul.mubr.f32.gmra.mrb[0].mxu0 %v402
    %v497 = vpop.f32.mrb[0].mxu0
    %v498 = vadd.f32 %v424, %v497
    %v499 = vpop.f32.mrb[0].mxu0
    %500 = vdwg.mxu0
    %501 = vst [vmem:[#allocation11] sm:$0xff] %v493
    %502 = vst [vmem:[#allocation11 + $0x8] sm:$0xff] %v498
    // Predicated region
    $region58: #{tpu_custom_call.1} parent=1 // pred_check
      _
    $region59: #{tpu_custom_call.1} parent=1 // pred_check_branch
      %504 = sbr.rel (0) target = $region61
    $region60: #{tpu_custom_call.1} parent=1 // pred_region
      %s506 = ssub.s32 256, 256
      %507 = vsyncadd [#allocation4], %s506
      %s508 = sshll.u32 [#allocation11], 4
      %s509 = int_to_ptr.vmem [resolvable:$true] %s508
      %514 = dma.vmem_to_hbm [thread:$0]  %s509, 256, %s9, [#allocation4], 128, 128, 8
    $region61: #{tpu_custom_call.1} parent=1 // pred_fallthru
      _
    // Predicated region
    $region62: #{tpu_custom_call.1} parent=1 // pred_check
      _
    $region63: #{tpu_custom_call.1} parent=1 // pred_check_branch
      %516 = sbr.rel (0) target = $region65
    $region64: #{tpu_custom_call.1} parent=1 // pred_region
      %517 = dma.done [#allocation4], 256
    $region65: #{tpu_custom_call.1} parent=1 // pred_fallthru
      _
    %518 = vsyncpa [#allocation3], 1
    %519 = vsyncpa [#allocation6], 1
    %520 = vsyncpa [#allocation9], 1
    %521 = vsyncpa [#allocation4], 1

</llo_original>
